<compile_context>
chip_gen: v7x
topology: tpu7x:2x2x1
jax: 0.10.0
libtpu: 0.0.40
codegen_flags: <defaults>
</compile_context>

<pallas_src>
import functools

import jax
import jax.numpy as jnp
from jax.experimental import pallas as pl
from jax.experimental.pallas import tpu as pltpu


def _round_up(x, m):
    return (x + m - 1) // m * m


def _ffn_kernel(x_ref, gamma_ref, beta_ref, w1_ref, b1_ref, w2_ref, b2_ref,
                o_ref, xn_ref, acc_ref, *, eps, d_model):
    """Grid = (row_tiles, inner_tiles).  Axis 1 is the d_inner reduction."""
    k = pl.program_id(1)

    # --- once per row tile: LayerNorm (f32 math, masked to the real d_model) ---
    @pl.when(k == 0)
    def _():
        x = x_ref[...].astype(jnp.float32)                       # (TM, Dp)
        dp = x.shape[-1]
        lane = jax.lax.broadcasted_iota(jnp.int32, (1, dp), 1)
        mask = lane < d_model                                    # padded lanes excluded
        inv_d = jnp.float32(1.0 / d_model)
        mean = jnp.sum(x, axis=-1, keepdims=True) * inv_d        # padded x lanes are 0
        diff = jnp.where(mask, x - mean, 0.0)
        var = jnp.sum(diff * diff, axis=-1, keepdims=True) * inv_d
        xn = diff * jax.lax.rsqrt(var + eps)
        xn = xn * gamma_ref[...].astype(jnp.float32) + beta_ref[...].astype(jnp.float32)
        # Single cast to the MXU feed dtype (bf16 in the demo); cached for all k steps.
        xn_ref[...] = xn.astype(xn_ref.dtype)
        acc_ref[...] = jnp.zeros_like(acc_ref)

    # --- expand chunk: (TM, Dp) @ (Dp, TK) + b1 chunk, ReLU --------------------
    h = jnp.dot(xn_ref[...], w1_ref[...], preferred_element_type=jnp.float32)
    h = jnp.maximum(h + b1_ref[...].astype(jnp.float32), 0.0)

    # dropout: identity in eval mode

    # --- condense chunk, accumulate into f32 scratch ---------------------------
    acc_ref[...] += jnp.dot(h.astype(w2_ref.dtype), w2_ref[...],
                            preferred_element_type=jnp.float32)

    # --- finalize: add b2 and emit lane-dense output tile ----------------------
    @pl.when(k == pl.num_programs(1) - 1)
    def _():
        y = acc_ref[...] + b2_ref[...].astype(jnp.float32)
        o_ref[...] = y.astype(o_ref.dtype)


def position_wise_fcn(sequences, gamma, beta, w1, b1, w2, b2, *,
                      norm_eps=1e-6, row_tile=256, inner_tile=1024):
    """sequences: (N, P, D).  w1: (D, d_inner) = expand.weight^T, w2: (d_inner, D).
    gamma/beta/b1/b2 may be (dim,) or (1, dim)."""
    N, P, D = sequences.shape
    d_inner = w1.shape[1]
    assert w1.shape == (D, d_inner) and w2.shape == (d_inner, D)

    rows = N * P
    Dp = _round_up(D, 128)                                   # lane-dense feature dim
    # Adaptive tiles: never pad a tiny batch up to the full 256-row tile.
    row_tile = max(16, min(row_tile, _round_up(rows, 16)))
    inner_tile = _round_up(min(inner_tile, _round_up(d_inner, 128)), 128)
    dip = _round_up(d_inner, inner_tile)                     # multiple of inner_tile
    rows_p = _round_up(rows, row_tile)

    cdt = w1.dtype                                           # dtype fed to the MXU

    # --- zero-pad everything to TPU-friendly shapes (wrapper-side, cheap) -------
    x2d = jnp.pad(sequences.reshape(rows, D),
                  ((0, rows_p - rows), (0, Dp - D)))
    gamma_p = jnp.pad(jnp.reshape(gamma, (1, D)), ((0, 0), (0, Dp - D)))
    beta_p = jnp.pad(jnp.reshape(beta, (1, D)), ((0, 0), (0, Dp - D)))
    w1_p = jnp.pad(w1, ((0, Dp - D), (0, dip - d_inner)))
    b1_p = jnp.pad(jnp.reshape(b1, (1, d_inner)), ((0, 0), (0, dip - d_inner)))
    w2_p = jnp.pad(w2, ((0, dip - d_inner), (0, Dp - D)))
    b2_p = jnp.pad(jnp.reshape(b2, (1, D)), ((0, 0), (0, Dp - D)))

    grid = (rows_p // row_tile, dip // inner_tile)

    # --- cost estimate (two matmuls dominate) ----------------------------------
    itb = jnp.dtype(sequences.dtype).itemsize
    wtb = jnp.dtype(cdt).itemsize
    bytes_accessed = int(
        x2d.size * itb + rows_p * Dp * itb
        + (w1_p.size + w2_p.size) * wtb
        + (gamma_p.size + beta_p.size + b1_p.size + b2_p.size) * 4)
    cost = pl.CostEstimate(flops=int(4 * rows_p * Dp * dip),
                           transcendentals=int(rows_p),
                           bytes_accessed=bytes_accessed)

    # --- VMEM budget: tiles double-buffered + scratch, clamped to sane limits ---
    vmem_est = (
        2 * row_tile * Dp * itb                       # x tile (double-buffered)
        + 2 * row_tile * Dp * itb                     # out tile
        + 2 * (Dp * inner_tile + inner_tile * Dp) * wtb   # streamed W1/W2 tiles
        + row_tile * Dp * (wtb + 4)                   # xn + f32 accumulator scratch
        + 8 * (Dp + inner_tile) * 4)                  # small vectors
    vmem_limit = int(min(max(vmem_est * 1.25, 32 * 2**20), 128 * 2**20))

    out2d = pl.pallas_call(
        functools.partial(_ffn_kernel, eps=norm_eps, d_model=D),
        out_shape=jax.ShapeDtypeStruct((rows_p, Dp), sequences.dtype),
        grid_spec=pltpu.PrefetchScalarGridSpec(
            num_scalar_prefetch=0,
            grid=grid,
            in_specs=[
                pl.BlockSpec((row_tile, Dp), lambda i, k: (i, 0)),      # x tile
                pl.BlockSpec((1, Dp), lambda i, k: (0, 0)),             # gamma
                pl.BlockSpec((1, Dp), lambda i, k: (0, 0)),             # beta
                pl.BlockSpec((Dp, inner_tile), lambda i, k: (0, k)),    # W1 chunk
                pl.BlockSpec((1, inner_tile), lambda i, k: (0, k)),     # b1 chunk
                pl.BlockSpec((inner_tile, Dp), lambda i, k: (k, 0)),    # W2 chunk
                pl.BlockSpec((1, Dp), lambda i, k: (0, 0)),             # b2
            ],
            out_specs=pl.BlockSpec((row_tile, Dp), lambda i, k: (i, 0)),
            scratch_shapes=[
                pltpu.VMEM((row_tile, Dp), cdt),          # cached LayerNorm output
                pltpu.VMEM((row_tile, Dp), jnp.float32),  # f32 accumulator
            ],
        ),
        compiler_params=pltpu.CompilerParams(
            dimension_semantics=("parallel", "arbitrary"),
            vmem_limit_bytes=vmem_limit),
        cost_estimate=cost,
    )(x2d, gamma_p, beta_p, w1_p, b1_p, w2_p, b2_p)

    out = out2d[:rows, :D].reshape(N, P, D)
    # (output, gating_variances) -- gating_variances is None for the nn.Linear expand
    return out, None


def _xavier_uniform(key, fan_in, fan_out, dtype=jnp.float32):
    limit = (6.0 / (fan_in + fan_out)) ** 0.5
    return jax.random.uniform(key, (fan_in, fan_out), dtype, -limit, limit)


if __name__ == "__main__":
    # Small shapes consistent with the module: N=2 sequences, P=8 tokens,
    # d_model=32, d_inner=64.
    N, P, d_model, d_inner = 2, 8, 32, 64
    norm_eps = 1e-6
    dt = jnp.bfloat16  # MXU-native feed dtype

    key = jax.random.PRNGKey(0)
    k_x, k_w1, k_w2, k_g, k_b, k_b1, k_b2 = jax.random.split(key, 7)

    sequences = jax.random.normal(k_x, (N, P, d_model), jnp.float32).astype(dt)

    # Parameters (shapes match the PyTorch module; LN params / biases kept f32).
    gamma = 1.0 + 0.1 * jax.random.normal(k_g, (d_model,), jnp.float32)
    beta = 0.1 * jax.random.normal(k_b, (d_model,), jnp.float32)
    w1 = _xavier_uniform(k_w1, d_model, d_inner).astype(dt)   # expand.weight^T
    b1 = 0.05 * jax.random.normal(k_b1, (d_inner,), jnp.float32)
    w2 = _xavier_uniform(k_w2, d_inner, d_model).astype(dt)   # condense.weight^T
    b2 = 0.05 * jax.random.normal(k_b2, (d_model,), jnp.float32)

    out, gating_variances = position_wise_fcn(
        sequences, gamma, beta, w1, b1, w2, b2, norm_eps=norm_eps)
    out = jax.block_until_ready(out)

    # Pure-JAX reference with the same bf16 rounding points as the kernel.
    x32 = sequences.astype(jnp.float32).reshape(-1, d_model)
    mu = jnp.mean(x32, axis=-1, keepdims=True)
    va = jnp.mean((x32 - mu) ** 2, axis=-1, keepdims=True)
    xn = (x32 - mu) * jax.lax.rsqrt(va + norm_eps) * gamma + beta
    h = jnp.dot(xn.astype(dt), w1, preferred_element_type=jnp.float32) + b1
    h = jnp.maximum(h, 0.0)
    y = jnp.dot(h.astype(dt), w2, preferred_element_type=jnp.float32) + b2
    ref = y.reshape(N, P, d_model)

    out_f32 = out.astype(jnp.float32)
    err = float(jnp.max(jnp.abs(out_f32 - ref)))
    assert jnp.allclose(out_f32, ref, atol=3e-2, rtol=3e-2), f"mismatch vs reference (max err {err})"
    assert gating_variances is None

    print("KERNEL_OK")
</pallas_src>

<mosaic_0001>
module attributes {stable_mosaic.version = 11 : i64} {
  func.func @_ffn_kernel(%arg0: i32, %arg1: i32, %arg2: memref<16x128xbf16, #tpu.memory_space<vmem>>, %arg3: memref<1x128xf32, #tpu.memory_space<vmem>>, %arg4: memref<1x128xf32, #tpu.memory_space<vmem>>, %arg5: memref<128x128xbf16, #tpu.memory_space<vmem>>, %arg6: memref<1x128xf32, #tpu.memory_space<vmem>>, %arg7: memref<128x128xbf16, #tpu.memory_space<vmem>>, %arg8: memref<1x128xf32, #tpu.memory_space<vmem>>, %arg9: memref<16x128xbf16, #tpu.memory_space<vmem>>, %arg10: memref<16x128xbf16, #tpu.memory_space<vmem>>, %arg11: memref<16x128xf32, #tpu.memory_space<vmem>>) attributes {dimension_semantics = [#tpu.dimension_semantics<parallel>, #tpu.dimension_semantics<arbitrary>], iteration_bounds = array<i64: 1, 1>, scalar_prefetch = 0 : i64, scratch_operands = 2 : i64, tpu.core_type = #tpu.core_type<tc>, window_params = [{transform_indices = @transform_0, window_bounds = array<i64: 16, 128>}, {pipeline_mode = #tpu.pipeline_mode<synchronous>, transform_indices = @transform_1, window_bounds = array<i64: 1, 128>}, {pipeline_mode = #tpu.pipeline_mode<synchronous>, transform_indices = @transform_2, window_bounds = array<i64: 1, 128>}, {transform_indices = @transform_3, window_bounds = array<i64: 128, 128>}, {transform_indices = @transform_4, window_bounds = array<i64: 1, 128>}, {transform_indices = @transform_5, window_bounds = array<i64: 128, 128>}, {pipeline_mode = #tpu.pipeline_mode<synchronous>, transform_indices = @transform_6, window_bounds = array<i64: 1, 128>}, {transform_indices = @transform_7, window_bounds = array<i64: 16, 128>}]} {
    %c0_i32 = arith.constant 0 : i32
    %0 = arith.cmpi eq, %arg1, %c0_i32 : i32
    %1 = arith.extui %0 : i1 to i32
    %c0_i32_0 = arith.constant 0 : i32
    %2 = arith.cmpi ne, %1, %c0_i32_0 : i32
    scf.if %2 {
      %c0_16 = arith.constant 0 : index
      %c0_17 = arith.constant 0 : index
      %20 = vector.load %arg2[%c0_16, %c0_17] : memref<16x128xbf16, #tpu.memory_space<vmem>>, vector<16x128xbf16>
      %21 = arith.extf %20 : vector<16x128xbf16> to vector<16x128xf32>
      %22 = tpu.iota {dimensions = array<i32: 1>} : vector<1x128xi32>
      %c32_i32 = arith.constant 32 : i32
      %23 = vector.broadcast %c32_i32 : i32 to vector<1x128xi32>
      %24 = arith.cmpi slt, %22, %23 : vector<1x128xi32>
      %cst_18 = arith.constant dense<0.000000e+00> : vector<16xf32>
      %25 = vector.multi_reduction <add>, %21, %cst_18 [1] : vector<16x128xf32> to vector<16xf32>
      %26 = vector.shape_cast %25 : vector<16xf32> to vector<16x1xf32>
      %cst_19 = arith.constant 3.125000e-02 : f32
      %27 = vector.broadcast %cst_19 : f32 to vector<16x1xf32>
      %28 = arith.mulf %26, %27 : vector<16x1xf32>
      %29 = vector.broadcast %28 : vector<16x1xf32> to vector<16x128xf32>
      %30 = arith.subf %21, %29 : vector<16x128xf32>
      %cst_20 = arith.constant 0.000000e+00 : f32
      %31 = vector.shape_cast %24 : vector<1x128xi1> to vector<1x128xi1>
      %32 = vector.broadcast %31 : vector<1x128xi1> to vector<16x128xi1>
      %33 = vector.broadcast %cst_20 : f32 to vector<16x128xf32>
      %34 = arith.select %32, %30, %33 : vector<16x128xi1>, vector<16x128xf32>
      %35 = arith.mulf %34, %34 : vector<16x128xf32>
      %cst_21 = arith.constant dense<0.000000e+00> : vector<16xf32>
      %36 = vector.multi_reduction <add>, %35, %cst_21 [1] : vector<16x128xf32> to vector<16xf32>
      %37 = vector.shape_cast %36 : vector<16xf32> to vector<16x1xf32>
      %cst_22 = arith.constant 3.125000e-02 : f32
      %38 = vector.broadcast %cst_22 : f32 to vector<16x1xf32>
      %39 = arith.mulf %37, %38 : vector<16x1xf32>
      %cst_23 = arith.constant 9.99999997E-7 : f32
      %40 = vector.broadcast %cst_23 : f32 to vector<16x1xf32>
      %41 = arith.addf %39, %40 : vector<16x1xf32>
      %42 = math.rsqrt %41 : vector<16x1xf32>
      %43 = vector.broadcast %42 : vector<16x1xf32> to vector<16x128xf32>
      %44 = arith.mulf %34, %43 : vector<16x128xf32>
      %c0_24 = arith.constant 0 : index
      %c0_25 = arith.constant 0 : index
      %45 = vector.load %arg3[%c0_24, %c0_25] : memref<1x128xf32, #tpu.memory_space<vmem>>, vector<1x128xf32>
      %46 = vector.broadcast %45 : vector<1x128xf32> to vector<16x128xf32>
      %47 = arith.mulf %44, %46 : vector<16x128xf32>
      %c0_26 = arith.constant 0 : index
      %c0_27 = arith.constant 0 : index
      %48 = vector.load %arg4[%c0_26, %c0_27] : memref<1x128xf32, #tpu.memory_space<vmem>>, vector<1x128xf32>
      %49 = vector.broadcast %48 : vector<1x128xf32> to vector<16x128xf32>
      %50 = arith.addf %47, %49 : vector<16x128xf32>
      %51 = arith.truncf %50 : vector<16x128xf32> to vector<16x128xbf16>
      %c0_28 = arith.constant 0 : index
      %c0_29 = arith.constant 0 : index
      %52 = vector.load %arg10[%c0_28, %c0_29] : memref<16x128xbf16, #tpu.memory_space<vmem>>, vector<16x128xbf16>
      tpu.vector_store %arg10[%c0_28, %c0_29], %51 {strides = array<i32>} : memref<16x128xbf16, #tpu.memory_space<vmem>>, vector<16x128xbf16>,
      %cst_30 = arith.constant 0.000000e+00 : f32
      %53 = vector.broadcast %cst_30 : f32 to vector<16x128xf32>
      %c0_31 = arith.constant 0 : index
      %c0_32 = arith.constant 0 : index
      %54 = vector.load %arg11[%c0_31, %c0_32] : memref<16x128xf32, #tpu.memory_space<vmem>>, vector<16x128xf32>
      tpu.vector_store %arg11[%c0_31, %c0_32], %53 {strides = array<i32>} : memref<16x128xf32, #tpu.memory_space<vmem>>, vector<16x128xf32>,
    } else {
    }
    %c0 = arith.constant 0 : index
    %c0_1 = arith.constant 0 : index
    %3 = vector.load %arg10[%c0, %c0_1] : memref<16x128xbf16, #tpu.memory_space<vmem>>, vector<16x128xbf16>
    %c0_2 = arith.constant 0 : index
    %c0_3 = arith.constant 0 : index
    %4 = vector.load %arg5[%c0_2, %c0_3] : memref<128x128xbf16, #tpu.memory_space<vmem>>, vector<128x128xbf16>
    %cst = arith.constant dense<0.000000e+00> : vector<16x128xf32>
    %5 = tpu.matmul %3, %4, %cst {dimension_numbers = #tpu.dot_dimension_numbers<[1], [0], [0], [1], [0, 0, 1, 1], [], []>} : vector<16x128xbf16>, vector<128x128xbf16>, vector<16x128xf32> -> vector<16x128xf32>
    %c0_4 = arith.constant 0 : index
    %c0_5 = arith.constant 0 : index
    %6 = vector.load %arg6[%c0_4, %c0_5] : memref<1x128xf32, #tpu.memory_space<vmem>>, vector<1x128xf32>
    %7 = vector.broadcast %6 : vector<1x128xf32> to vector<16x128xf32>
    %8 = arith.addf %5, %7 : vector<16x128xf32>
    %cst_6 = arith.constant 0.000000e+00 : f32
    %9 = vector.broadcast %cst_6 : f32 to vector<16x128xf32>
    %10 = arith.maximumf %8, %9 : vector<16x128xf32>
    %c0_7 = arith.constant 0 : index
    %c0_8 = arith.constant 0 : index
    %11 = vector.load %arg11[%c0_7, %c0_8] : memref<16x128xf32, #tpu.memory_space<vmem>>, vector<16x128xf32>
    %12 = arith.truncf %10 : vector<16x128xf32> to vector<16x128xbf16>
    %c0_9 = arith.constant 0 : index
    %c0_10 = arith.constant 0 : index
    %13 = vector.load %arg7[%c0_9, %c0_10] : memref<128x128xbf16, #tpu.memory_space<vmem>>, vector<128x128xbf16>
    %cst_11 = arith.constant dense<0.000000e+00> : vector<16x128xf32>
    %14 = tpu.matmul %12, %13, %cst_11 {dimension_numbers = #tpu.dot_dimension_numbers<[1], [0], [0], [1], [0, 0, 1, 1], [], []>} : vector<16x128xbf16>, vector<128x128xbf16>, vector<16x128xf32> -> vector<16x128xf32>
    %15 = arith.addf %11, %14 : vector<16x128xf32>
    %c0_12 = arith.constant 0 : index
    %c0_13 = arith.constant 0 : index
    %16 = vector.load %arg11[%c0_12, %c0_13] : memref<16x128xf32, #tpu.memory_space<vmem>>, vector<16x128xf32>
    tpu.vector_store %arg11[%c0_12, %c0_13], %15 {strides = array<i32>} : memref<16x128xf32, #tpu.memory_space<vmem>>, vector<16x128xf32>,
    %c0_i32_14 = arith.constant 0 : i32
    %17 = arith.cmpi eq, %arg1, %c0_i32_14 : i32
    %18 = arith.extui %17 : i1 to i32
    %c0_i32_15 = arith.constant 0 : i32
    %19 = arith.cmpi ne, %18, %c0_i32_15 : i32
    scf.if %19 {
      %c0_16 = arith.constant 0 : index
      %c0_17 = arith.constant 0 : index
      %20 = vector.load %arg11[%c0_16, %c0_17] : memref<16x128xf32, #tpu.memory_space<vmem>>, vector<16x128xf32>
      %c0_18 = arith.constant 0 : index
      %c0_19 = arith.constant 0 : index
      %21 = vector.load %arg8[%c0_18, %c0_19] : memref<1x128xf32, #tpu.memory_space<vmem>>, vector<1x128xf32>
      %22 = vector.broadcast %21 : vector<1x128xf32> to vector<16x128xf32>
      %23 = arith.addf %20, %22 : vector<16x128xf32>
      %24 = arith.truncf %23 : vector<16x128xf32> to vector<16x128xbf16>
      %c0_20 = arith.constant 0 : index
      %c0_21 = arith.constant 0 : index
      %25 = vector.load %arg9[%c0_20, %c0_21] : memref<16x128xbf16, #tpu.memory_space<vmem>>, vector<16x128xbf16>
      tpu.vector_store %arg9[%c0_20, %c0_21], %24 {strides = array<i32>} : memref<16x128xbf16, #tpu.memory_space<vmem>>, vector<16x128xbf16>,
    } else {
    }
    return
  }
  func.func @transform_0(%arg0: i32, %arg1: i32) -> (i32, i32) {
    %c0_i32 = arith.constant 0 : i32
    %c0_i32_0 = arith.constant 0 : i32
    return %arg0, %c0_i32 : i32, i32
  }
  func.func @transform_1(%arg0: i32, %arg1: i32) -> (i32, i32) {
    %c0_i32 = arith.constant 0 : i32
    %c0_i32_0 = arith.constant 0 : i32
    %c0_i32_1 = arith.constant 0 : i32
    return %c0_i32, %c0_i32_0 : i32, i32
  }
  func.func @transform_2(%arg0: i32, %arg1: i32) -> (i32, i32) {
    %c0_i32 = arith.constant 0 : i32
    %c0_i32_0 = arith.constant 0 : i32
    %c0_i32_1 = arith.constant 0 : i32
    return %c0_i32, %c0_i32_0 : i32, i32
  }
  func.func @transform_3(%arg0: i32, %arg1: i32) -> (i32, i32) {
    %c0_i32 = arith.constant 0 : i32
    %c0_i32_0 = arith.constant 0 : i32
    return %c0_i32, %arg1 : i32, i32
  }
  func.func @transform_4(%arg0: i32, %arg1: i32) -> (i32, i32) {
    %c0_i32 = arith.constant 0 : i32
    %c0_i32_0 = arith.constant 0 : i32
    return %c0_i32, %arg1 : i32, i32
  }
  func.func @transform_5(%arg0: i32, %arg1: i32) -> (i32, i32) {
    %c0_i32 = arith.constant 0 : i32
    %c0_i32_0 = arith.constant 0 : i32
    return %arg1, %c0_i32 : i32, i32
  }
  func.func @transform_6(%arg0: i32, %arg1: i32) -> (i32, i32) {
    %c0_i32 = arith.constant 0 : i32
    %c0_i32_0 = arith.constant 0 : i32
    %c0_i32_1 = arith.constant 0 : i32
    return %c0_i32, %c0_i32_0 : i32, i32
  }
  func.func @transform_7(%arg0: i32, %arg1: i32) -> (i32, i32) {
    %c0_i32 = arith.constant 0 : i32
    %c0_i32_0 = arith.constant 0 : i32
    return %arg0, %c0_i32 : i32, i32
  }
}

</mosaic_0001>

<llo_original>
// kernel: tpu_custom_call.1
$region0: #{tpu_custom_call.1}
  #allocation0 [shape = 'u32[]', space=smem, size = 0x4, offset = 0x4, fixed_abs, tag = 'smem constant byte address 0x4 - core index']
  #allocation1 [shape = 'u32[144,128]{1,0:T(1,128)}', space=vmem, size = 0x12000, scoped, tag = 'internal scratch']
  #allocation2 [shape = 'bf16[16,128]{1,0:T(16,128)(2,1)}', space=vmem, size = 0x1000, scoped, tag = 'scratch operand']
  #allocation3 [shape = 'f32[16,128]{1,0:T(8,128)}', space=vmem, size = 0x2000, scoped, tag = 'scratch operand']
  %s0 = inlined_call_operand.hbm [shape: bf16[16,128], index: 0, kind: input, shape index: {}]
  %s1 = inlined_call_operand.vmem [shape: f32[1,128], index: 1, kind: input, shape index: {}]
  %s2 = inlined_call_operand.vmem [shape: f32[1,128], index: 2, kind: input, shape index: {}]
  %s3 = inlined_call_operand.hbm [shape: bf16[128,128], index: 3, kind: input, shape index: {}]
  %s4 = inlined_call_operand.vmem [shape: f32[1,128], index: 4, kind: input, shape index: {}]
  %s5 = inlined_call_operand.hbm [shape: bf16[128,128], index: 5, kind: input, shape index: {}]
  %s6 = inlined_call_operand.vmem [shape: f32[1,128], index: 6, kind: input, shape index: {}]
  %s7 = inlined_call_operand.hbm [shape: bf16[16,128], index: 7, kind: output, shape index: {}]
  %s8 = sld [smem:[#allocation0]]
  $region58: #{tpu_custom_call.1} parent=0
    _
  %s10 = ssub.s32 1, %s8
  %s11 = scalar_select 0, %s10, %s8
  $region1: #{tpu_custom_call.1} parent=0
    #allocation4 [shape = 'u8[4096]{0}', space=vmem, size = 0x1000, scoped, tag = 'input window, operand 0, single buffered']
    #allocation5 [shape = 's32[1]{0}', space=sflag, size = 0x4, scoped, tag = 'scoped memory for tpu_custom_call.1']
    #allocation6 [shape = 's32[1]{0}', space=sflag, size = 0x4, scoped, tag = 'scoped memory for tpu_custom_call.1']
    #allocation7 [shape = 'u8[32768]{0}', space=vmem, size = 0x8000, scoped, tag = 'input window, operand 3, single buffered']
    #allocation8 [shape = 's32[1]{0}', space=sflag, size = 0x4, scoped, tag = 'scoped memory for tpu_custom_call.1']
    #allocation9 [shape = 'u8[32768]{0}', space=vmem, size = 0x8000, scoped, tag = 'input window, operand 5, single buffered']
    #allocation10 [shape = 'u8[4096]{0}', space=vmem, size = 0x1000, scoped, tag = 'output window, operand 0, single buffered']
    %12 = vsyncpa [#allocation5], 0
    %13 = vsyncpa [#allocation8], 0
    %14 = vsyncpa [#allocation6], 0
    // Predicated region
    $region2: #{tpu_custom_call.1} parent=1 // pred_check
      _
    $region3: #{tpu_custom_call.1} parent=1 // pred_check_branch
      %16 = sbr.rel (0) target = $region5
    $region4: #{tpu_custom_call.1} parent=1 // pred_region
      %s18 = ssub.s32 128, 128
      %19 = vsyncadd [#allocation5], %s18
      %s20 = sshll.u32 [#allocation4], 4
      %s21 = int_to_ptr.vmem [resolvable:$true] %s20
      %26 = dma.hbm_to_vmem [thread:$0]  %s0, 128, %s21, [#allocation5], 64, 64, 4
    $region5: #{tpu_custom_call.1} parent=1 // pred_fallthru
      _
    // Predicated region
    $region6: #{tpu_custom_call.1} parent=1 // pred_check
      _
    $region7: #{tpu_custom_call.1} parent=1 // pred_check_branch
      %28 = sbr.rel (0) target = $region9
    $region8: #{tpu_custom_call.1} parent=1 // pred_region
      _
    $region9: #{tpu_custom_call.1} parent=1 // pred_fallthru
      _
    // Predicated region
    $region10: #{tpu_custom_call.1} parent=1 // pred_check
      _
    $region11: #{tpu_custom_call.1} parent=1 // pred_check_branch
      %30 = sbr.rel (0) target = $region13
    $region12: #{tpu_custom_call.1} parent=1 // pred_region
      _
    $region13: #{tpu_custom_call.1} parent=1 // pred_fallthru
      _
    // Predicated region
    $region14: #{tpu_custom_call.1} parent=1 // pred_check
      _
    $region15: #{tpu_custom_call.1} parent=1 // pred_check_branch
      %32 = sbr.rel (0) target = $region17
    $region16: #{tpu_custom_call.1} parent=1 // pred_region
      %s34 = ssub.s32 1024, 1024
      %35 = vsyncadd [#allocation8], %s34
      %s36 = sshll.u32 [#allocation7], 4
      %s37 = int_to_ptr.vmem [resolvable:$true] %s36
      %42 = dma.hbm_to_vmem [thread:$0]  %s3, 1024, %s37, [#allocation8], 64, 64, 4
    $region17: #{tpu_custom_call.1} parent=1 // pred_fallthru
      _
    // Predicated region
    $region18: #{tpu_custom_call.1} parent=1 // pred_check
      _
    $region19: #{tpu_custom_call.1} parent=1 // pred_check_branch
      %44 = sbr.rel (0) target = $region21
    $region20: #{tpu_custom_call.1} parent=1 // pred_region
      _
    $region21: #{tpu_custom_call.1} parent=1 // pred_fallthru
      _
    // Predicated region
    $region22: #{tpu_custom_call.1} parent=1 // pred_check
      _
    $region23: #{tpu_custom_call.1} parent=1 // pred_check_branch
      %46 = sbr.rel (0) target = $region25
    $region24: #{tpu_custom_call.1} parent=1 // pred_region
      %s48 = ssub.s32 1024, 1024
      %49 = vsyncadd [#allocation8], %s48
      %s50 = sshll.u32 [#allocation9], 4
      %s51 = int_to_ptr.vmem [resolvable:$true] %s50
      %56 = dma.hbm_to_vmem [thread:$0]  %s5, 1024, %s51, [#allocation8], 64, 64, 4
    $region25: #{tpu_custom_call.1} parent=1 // pred_fallthru
      _
    // Predicated region
    $region26: #{tpu_custom_call.1} parent=1 // pred_check
      _
    $region27: #{tpu_custom_call.1} parent=1 // pred_check_branch
      %58 = sbr.rel (0) target = $region29
    $region28: #{tpu_custom_call.1} parent=1 // pred_region
      _
    $region29: #{tpu_custom_call.1} parent=1 // pred_fallthru
      _
    // Predicated region
    $region30: #{tpu_custom_call.1} parent=1 // pred_check
      _
    $region31: #{tpu_custom_call.1} parent=1 // pred_check_branch
      %60 = sbr.rel (0) target = $region33
    $region32: #{tpu_custom_call.1} parent=1 // pred_region
      %61 = dma.done [#allocation5], 128
    $region33: #{tpu_custom_call.1} parent=1 // pred_fallthru
      _
    // Predicated region
    $region34: #{tpu_custom_call.1} parent=1 // pred_check
      _
    $region35: #{tpu_custom_call.1} parent=1 // pred_check_branch
      %63 = sbr.rel (0) target = $region37
    $region36: #{tpu_custom_call.1} parent=1 // pred_region
      %64 = dma.done [#allocation8], 1024
    $region37: #{tpu_custom_call.1} parent=1 // pred_fallthru
      _
    // Predicated region
    $region38: #{tpu_custom_call.1} parent=1 // pred_check
      _
    $region39: #{tpu_custom_call.1} parent=1 // pred_check_branch
      %66 = sbr.rel (0) target = $region41
    $region40: #{tpu_custom_call.1} parent=1 // pred_region
      %67 = dma.done [#allocation8], 1024
    $region41: #{tpu_custom_call.1} parent=1 // pred_fallthru
      _
    %p69 = scmp.eq.s32.totalorder 0, 0
    // Predicated region
    $region42: #{tpu_custom_call.1} parent=1 // pred_check
      %p70 = pneg %p69
    $region43: #{tpu_custom_call.1} parent=1 // pred_check_branch
      %72 = sbr.rel (%p70) target = $region45
    $region44: #{tpu_custom_call.1} parent=1 // pred_region
      %v73 = vld [vmem:[#allocation4] sm:$0xf]
      %v74 = vld [vmem:[#allocation4 + $0x4] sm:$0xf]
      %v75 = vunpack.c.l.bf16 %v73
      %v76 = vunpack.c.l.bf16 %v74
      %v77 = vlaneseq
      %v78 = vand.u32 %v77, 127
      %vm79 = vcmp.lt.s32.totalorder %v78, 32
      %80 = vadd.xlane.f32.xlu0 %v75
      %v81 = vpop.xlane.xlu0 %80
      %82 = vadd.xlane.f32.xlu0 %v76
      %v83 = vpop.xlane.xlu0 %82
      %v84 = vmul.f32 %v81, 0.03125
      %v85 = vmul.f32 %v83, 0.03125
      %v86 = vsub.f32 %v75, %v84
      %v87 = vsub.f32 %v76, %v85
      %v88 = vsel %vm79, 1, 0
      %vm89 = vcmp.eq.s32.totalorder %v88, 1
      %v90 = vsel %vm89, %v86, 0.0
      %v91 = vsel %vm89, %v87, 0.0
      %v92 = vmul.f32 %v90, %v90
      %v93 = vmul.f32 %v91, %v91
      %94 = vadd.xlane.f32.xlu0 %v92
      %v95 = vpop.xlane.xlu0 %94
      %96 = vadd.xlane.f32.xlu0 %v93
      %v97 = vpop.xlane.xlu0 %96
      %v98 = vmul.f32 %v95, 0.03125
      %v99 = vmul.f32 %v97, 0.03125
      %v100 = vadd.f32 %v98, 1e-06
      %v101 = vadd.f32 %v99, 1e-06
      %v102 = vrsqrt.pop %v100
      %v103 = vrsqrt.pop %v101
      %v104 = vmul.f32 %v90, %v102
      %v105 = vmul.f32 %v91, %v103
      %v106 = vld [vmem:[%s1] sm:$0x1]
      %v108 = vlaneseq
      %v109 = vshrl.u32 %v108, 7
      %v110 = vsub.s32 0, %v109
      %v111 = vrot.slane %v106, %v110
      %v113 = vmul.f32 %v104, %v111
      %v114 = vmul.f32 %v105, %v111
      %v115 = vld [vmem:[%s2] sm:$0x1]
      %v117 = vlaneseq
      %v118 = vshrl.u32 %v117, 7
      %v119 = vsub.s32 0, %v118
      %v120 = vrot.slane %v115, %v119
      %v122 = vadd.f32 %v113, %v120
      %v123 = vadd.f32 %v114, %v120
      %v124 = vpack.c.bf16 %v123, %v122
      %125 = vst [vmem:[#allocation2] sm:$0xff] %v124
      %126 = vst [vmem:[#allocation3] sm:$0xff] 0.0
      %127 = vst [vmem:[#allocation3 + $0x8] sm:$0xff] 0.0
    $region45: #{tpu_custom_call.1} parent=1 // pred_fallthru
      _
    %v128 = vld [vmem:[#allocation2] sm:$0xff]
    %v129 = vld [vmem:[#allocation7] sm:$0xf]
    %v130 = vld [vmem:[#allocation7 + $0x4] sm:$0xf]
    %v131 = vld [vmem:[#allocation7 + $0x8] sm:$0xf]
    %v132 = vld [vmem:[#allocation7 + $0xc] sm:$0xf]
    %v133 = vld [vmem:[#allocation7 + $0x10] sm:$0xf]
    %v134 = vld [vmem:[#allocation7 + $0x14] sm:$0xf]
    %v135 = vld [vmem:[#allocation7 + $0x18] sm:$0xf]
    %v136 = vld [vmem:[#allocation7 + $0x1c] sm:$0xf]
    %v137 = vld [vmem:[#allocation7 + $0x20] sm:$0xf]
    %v138 = vld [vmem:[#allocation7 + $0x24] sm:$0xf]
    %v139 = vld [vmem:[#allocation7 + $0x28] sm:$0xf]
    %v140 = vld [vmem:[#allocation7 + $0x2c] sm:$0xf]
    %v141 = vld [vmem:[#allocation7 + $0x30] sm:$0xf]
    %v142 = vld [vmem:[#allocation7 + $0x34] sm:$0xf]
    %v143 = vld [vmem:[#allocation7 + $0x38] sm:$0xf]
    %v144 = vld [vmem:[#allocation7 + $0x3c] sm:$0xf]
    %v145 = vld [vmem:[%s4] sm:$0x1]
    %v147 = vlaneseq
    %v148 = vshrl.u32 %v147, 7
    %v149 = vsub.s32 0, %v148
    %v150 = vrot.slane %v145, %v149
    %v168 = vunpack.c.l.b16 %v129
    %v169 = vunpack.c.l.b16 %v130
    %v170 = vunpack.c.l.b16 %v131
    %v171 = vunpack.c.l.b16 %v132
    %v172 = vunpack.c.l.b16 %v133
    %v173 = vunpack.c.l.b16 %v134
    %v174 = vunpack.c.l.b16 %v135
    %v175 = vunpack.c.l.b16 %v136
    %v176 = vunpack.c.l.b16 %v137
    %v177 = vunpack.c.l.b16 %v138
    %v178 = vunpack.c.l.b16 %v139
    %v179 = vunpack.c.l.b16 %v140
    %v180 = vunpack.c.l.b16 %v141
    %v181 = vunpack.c.l.b16 %v142
    %v182 = vunpack.c.l.b16 %v143
    %v183 = vunpack.c.l.b16 %v144
    %v184 = vpack.c.b16 %v169, %v168
    %v185 = vpack.c.b16 %v171, %v170
    %v186 = vpack.c.b16 %v173, %v172
    %v187 = vpack.c.b16 %v175, %v174
    %v188 = vpack.c.b16 %v177, %v176
    %v189 = vpack.c.b16 %v179, %v178
    %v190 = vpack.c.b16 %v181, %v180
    %v191 = vpack.c.b16 %v183, %v182
    %200 = vmatprep.subr.bf16.mxu0 0
    %201 = vmatpush1.bf16.msra.mxu0 %v184
    %202 = vmatprep.subr.bf16.mxu0 0
    %203 = vmatpush1.bf16.msra.mxu0 %v185
    %204 = vmatprep.subr.bf16.mxu0 0
    %205 = vmatpush1.bf16.msra.mxu0 %v186
    %206 = vmatprep.subr.bf16.mxu0 0
    %207 = vmatpush1.bf16.msra.mxu0 %v187
    %208 = vmatprep.subr.bf16.mxu0 0
    %209 = vmatpush1.bf16.msra.mxu0 %v188
    %210 = vmatprep.subr.bf16.mxu0 0
    %211 = vmatpush1.bf16.msra.mxu0 %v189
    %212 = vmatprep.subr.bf16.mxu0 0
    %213 = vmatpush1.bf16.msra.mxu0 %v190
    %214 = vmatprep.subr.bf16.mxu0 0
    %215 = vmatpush1.bf16.msra.mxu0 %v191
    %216 = vmatprep.subr.bf16.mxu0 0
    %217 = vmatpush1.bf16.msra.mxu0 0
    %218 = vmatprep.subr.bf16.mxu0 0
    %219 = vmatpush1.bf16.msra.mxu0 0
    %220 = vmatprep.subr.bf16.mxu0 0
    %221 = vmatpush1.bf16.msra.mxu0 0
    %222 = vmatprep.subr.bf16.mxu0 0
    %223 = vmatpush1.bf16.msra.mxu0 0
    %224 = vmatprep.subr.bf16.mxu0 0
    %225 = vmatpush1.bf16.msra.mxu0 0
    %226 = vmatprep.subr.bf16.mxu0 0
    %227 = vmatpush1.bf16.msra.mxu0 0
    %228 = vmatprep.subr.bf16.mxu0 0
    %229 = vmatpush1.bf16.msra.mxu0 0
    %230 = vmatprep.subr.bf16.mxu0 0
    %231 = vmatpush1.bf16.msra.mxu0 0
    %232 = vmatprep.mubr.bf16.mxu0 0
    %233 = vmatmul.mubr.bf16.gmra.mrb[0].mxu0 %v128
    %v234 = vpop.f32.mrb[0].mxu0
    %v235 = vadd.f32 %v150, %v234
    %v236 = vpop.f32.mrb[0].mxu0
    %v237 = vpop.f32.mrb[0].mxu0
    %v238 = vadd.f32 %v150, %v237
    %v239 = vpop.f32.mrb[0].mxu0
    %240 = vdwg.mxu0
    %v241 = vmax.f32 %v235, 0.0
    %v242 = vmax.f32 %v238, 0.0
    %v243 = vld [vmem:[#allocation3] sm:$0xff]
    %v244 = vld [vmem:[#allocation3 + $0x8] sm:$0xff]
    %v245 = vpack.c.bf16 %v242, %v241
    %v246 = vld [vmem:[#allocation9] sm:$0xf]
    %v247 = vld [vmem:[#allocation9 + $0x4] sm:$0xf]
    %v248 = vld [vmem:[#allocation9 + $0x8] sm:$0xf]
    %v249 = vld [vmem:[#allocation9 + $0xc] sm:$0xf]
    %v250 = vld [vmem:[#allocation9 + $0x10] sm:$0xf]
    %v251 = vld [vmem:[#allocation9 + $0x14] sm:$0xf]
    %v252 = vld [vmem:[#allocation9 + $0x18] sm:$0xf]
    %v253 = vld [vmem:[#allocation9 + $0x1c] sm:$0xf]
    %v254 = vld [vmem:[#allocation9 + $0x20] sm:$0xf]
    %v255 = vld [vmem:[#allocation9 + $0x24] sm:$0xf]
    %v256 = vld [vmem:[#allocation9 + $0x28] sm:$0xf]
    %v257 = vld [vmem:[#allocation9 + $0x2c] sm:$0xf]
    %v258 = vld [vmem:[#allocation9 + $0x30] sm:$0xf]
    %v259 = vld [vmem:[#allocation9 + $0x34] sm:$0xf]
    %v260 = vld [vmem:[#allocation9 + $0x38] sm:$0xf]
    %v261 = vld [vmem:[#allocation9 + $0x3c] sm:$0xf]
    %v278 = vunpack.c.l.b16 %v246
    %v279 = vunpack.c.l.b16 %v247
    %v280 = vunpack.c.l.b16 %v248
    %v281 = vunpack.c.l.b16 %v249
    %v282 = vunpack.c.l.b16 %v250
    %v283 = vunpack.c.l.b16 %v251
    %v284 = vunpack.c.l.b16 %v252
    %v285 = vunpack.c.l.b16 %v253
    %v286 = vunpack.c.l.b16 %v254
    %v287 = vunpack.c.l.b16 %v255
    %v288 = vunpack.c.l.b16 %v256
    %v289 = vunpack.c.l.b16 %v257
    %v290 = vunpack.c.l.b16 %v258
    %v291 = vunpack.c.l.b16 %v259
    %v292 = vunpack.c.l.b16 %v260
    %v293 = vunpack.c.l.b16 %v261
    %v294 = vpack.c.b16 %v279, %v278
    %v295 = vpack.c.b16 %v281, %v280
    %v296 = vpack.c.b16 %v283, %v282
    %v297 = vpack.c.b16 %v285, %v284
    %v298 = vpack.c.b16 %v287, %v286
    %v299 = vpack.c.b16 %v289, %v288
    %v300 = vpack.c.b16 %v291, %v290
    %v301 = vpack.c.b16 %v293, %v292
    %310 = vmatprep.subr.bf16.mxu0 0
    %311 = vmatpush1.bf16.msra.mxu0 %v294
    %312 = vmatprep.subr.bf16.mxu0 0
    %313 = vmatpush1.bf16.msra.mxu0 %v295
    %314 = vmatprep.subr.bf16.mxu0 0
    %315 = vmatpush1.bf16.msra.mxu0 %v296
    %316 = vmatprep.subr.bf16.mxu0 0
    %317 = vmatpush1.bf16.msra.mxu0 %v297
    %318 = vmatprep.subr.bf16.mxu0 0
    %319 = vmatpush1.bf16.msra.mxu0 %v298
    %320 = vmatprep.subr.bf16.mxu0 0
    %321 = vmatpush1.bf16.msra.mxu0 %v299
    %322 = vmatprep.subr.bf16.mxu0 0
    %323 = vmatpush1.bf16.msra.mxu0 %v300
    %324 = vmatprep.subr.bf16.mxu0 0
    %325 = vmatpush1.bf16.msra.mxu0 %v301
    %326 = vmatprep.subr.bf16.mxu0 0
    %327 = vmatpush1.bf16.msra.mxu0 0
    %328 = vmatprep.subr.bf16.mxu0 0
    %329 = vmatpush1.bf16.msra.mxu0 0
    %330 = vmatprep.subr.bf16.mxu0 0
    %331 = vmatpush1.bf16.msra.mxu0 0
    %332 = vmatprep.subr.bf16.mxu0 0
    %333 = vmatpush1.bf16.msra.mxu0 0
    %334 = vmatprep.subr.bf16.mxu0 0
    %335 = vmatpush1.bf16.msra.mxu0 0
    %336 = vmatprep.subr.bf16.mxu0 0
    %337 = vmatpush1.bf16.msra.mxu0 0
    %338 = vmatprep.subr.bf16.mxu0 0
    %339 = vmatpush1.bf16.msra.mxu0 0
    %340 = vmatprep.subr.bf16.mxu0 0
    %341 = vmatpush1.bf16.msra.mxu0 0
    %342 = vmatprep.mubr.bf16.mxu0 0
    %343 = vmatmul.mubr.bf16.gmra.mrb[0].mxu0 %v245
    %v344 = vpop.f32.mrb[0].mxu0
    %v345 = vadd.f32 0.0, %v344
    %v346 = vpop.f32.mrb[0].mxu0
    %v347 = vpop.f32.mrb[0].mxu0
    %v348 = vadd.f32 0.0, %v347
    %v349 = vpop.f32.mrb[0].mxu0
    %350 = vdwg.mxu0
    %v351 = vadd.f32 %v243, %v345
    %v352 = vadd.f32 %v244, %v348
    %353 = vst [vmem:[#allocation3] sm:$0xff] %v351
    %354 = vst [vmem:[#allocation3 + $0x8] sm:$0xff] %v352
    // Predicated region
    $region46: #{tpu_custom_call.1} parent=1 // pred_check
      %p355 = pneg %p69
    $region47: #{tpu_custom_call.1} parent=1 // pred_check_branch
      %357 = sbr.rel (%p355) target = $region49
    $region48: #{tpu_custom_call.1} parent=1 // pred_region
      %v358 = vld [vmem:[#allocation3] sm:$0xff]
      %v359 = vld [vmem:[#allocation3 + $0x8] sm:$0xff]
      %v360 = vld [vmem:[%s6] sm:$0x1]
      %v362 = vlaneseq
      %v363 = vshrl.u32 %v362, 7
      %v364 = vsub.s32 0, %v363
      %v365 = vrot.slane %v360, %v364
      %v367 = vadd.f32 %v358, %v365
      %v368 = vadd.f32 %v359, %v365
      %v369 = vpack.c.bf16 %v368, %v367
      %v371 = vunpack.c.l.b16 %v369
      %v372 = vunpack.c.h.b16 %v369
      %v373 = vpack.c.b16 %v371, %v371
      %v374 = vpack.c.b16 %v372, %v372
      %377 = vst [vmem:[#allocation10] sm:$0xf] %v373
      %378 = vst [vmem:[#allocation10 + $0x4] sm:$0xf] %v374
    $region49: #{tpu_custom_call.1} parent=1 // pred_fallthru
      _
    // Predicated region
    $region50: #{tpu_custom_call.1} parent=1 // pred_check
      _
    $region51: #{tpu_custom_call.1} parent=1 // pred_check_branch
      %380 = sbr.rel (0) target = $region53
    $region52: #{tpu_custom_call.1} parent=1 // pred_region
      %s382 = ssub.s32 128, 128
      %383 = vsyncadd [#allocation6], %s382
      %s384 = sshll.u32 [#allocation10], 4
      %s385 = int_to_ptr.vmem [resolvable:$true] %s384
      %390 = dma.vmem_to_hbm [thread:$0]  %s385, 128, %s7, [#allocation6], 64, 64, 4
    $region53: #{tpu_custom_call.1} parent=1 // pred_fallthru
      _
    // Predicated region
    $region54: #{tpu_custom_call.1} parent=1 // pred_check
      _
    $region55: #{tpu_custom_call.1} parent=1 // pred_check_branch
      %392 = sbr.rel (0) target = $region57
    $region56: #{tpu_custom_call.1} parent=1 // pred_region
      %393 = dma.done [#allocation6], 128
    $region57: #{tpu_custom_call.1} parent=1 // pred_fallthru
      _
    %394 = vsyncpa [#allocation5], 1
    %395 = vsyncpa [#allocation8], 1
    %396 = vsyncpa [#allocation6], 1

</llo_original>
